<compile_context>
chip_gen: v5e
topology: v5e:2x2
jax: 0.10.0
libtpu: 0.0.40
codegen_flags: <defaults>
</compile_context>

<pallas_src>
import numpy as np
import jax
import jax.numpy as jnp
from jax.experimental import pallas as pl
from jax.experimental.pallas import tpu as pltpu


def _attention_kernel(use_mask):
    """Kernel body. Ref order: inputs..., outputs...

    Per grid step (one batch block of TB rows):
      h     : (TB, R)       patt : (TB, S, H)    feats : (TB, S, F)
      mask  : (TB, S)       wh   : (R, H)        bh    : (1, H)
      wa    : (1, H)        ba   : (1, 1) scalar in SMEM
      res   : (TB, F)       w    : (TB, S)       (lane-dense outputs)
    """

    def kernel(*refs):
        if use_mask:
            (h_ref, patt_ref, feats_ref, mask_ref,
             wh_ref, bh_ref, wa_ref, ba_ref,
             res_ref, w_ref) = refs
        else:
            (h_ref, patt_ref, feats_ref,
             wh_ref, bh_ref, wa_ref, ba_ref,
             res_ref, w_ref) = refs

        f32 = jnp.float32

        # h2att linear on the MXU: (TB, R) @ (R, H) + (1, H)  -> (TB, H)
        att_h = jnp.dot(h_ref[...].astype(f32), wh_ref[...].astype(f32),
                        preferred_element_type=f32) + bh_ref[...].astype(f32)

        # dot = tanh(p_att + att_h)  -> (TB, S, H)
        dot = jnp.tanh(patt_ref[...].astype(f32) + att_h[:, None, :])

        # alpha_net: contract H (lane axis) -> lane-major logits (TB, S)
        logits = jnp.sum(dot * wa_ref[...].astype(f32), axis=-1) + ba_ref[0, 0]

        # Softmax over S (lane axis); mask fused into the single normalization.
        m = jnp.max(logits, axis=-1, keepdims=True)
        e = jnp.exp(logits - m)
        if use_mask:
            e = e * mask_ref[...].astype(f32)
            denom = jnp.sum(e, axis=-1, keepdims=True) + 1e-8
        else:
            denom = jnp.sum(e, axis=-1, keepdims=True)          # >= 1, eps not needed
        w = e * pl.reciprocal(denom, approx=True)               # (TB, S)

        # Weighted feature sum on the MXU: (TB,1,S) @ (TB,S,F) -> (TB,1,F)
        res = jnp.einsum("bks,bsf->bkf", w[:, None, :],
                         feats_ref[...].astype(f32),
                         preferred_element_type=f32)
        res_ref[...] = res[:, 0, :].astype(res_ref.dtype)
        w_ref[...] = w.astype(w_ref.dtype)

    return kernel


def attention_pallas(h, att_feats, p_att_feats, params, att_masks=None):
    """Exact forward of the PyTorch Attention module -> (att_res, weight)."""
    B = h.shape[0]
    R = h.shape[-1]
    F = att_feats.shape[-1]
    S = int(np.prod(att_feats.shape)) // B // F
    H = params["wh"].shape[1]

    feats = att_feats.reshape(B, S, F)
    patt = p_att_feats.reshape(B, S, H)
    use_mask = att_masks is not None
    mask = att_masks.reshape(B, S) if use_mask else None

    # Batch block: fill all 8 sublanes / MXU M dimension, amortize per-step
    # pipeline overhead.  TB is a multiple of 8; batch is padded up to it.
    # TODO(synk): for very large S*H on v7x (64 MiB VMEM) cap TB lower and set
    #             pltpu.CompilerParams(vmem_limit_bytes=...) explicitly.
    TB = min(128, max(8, int(pl.next_power_of_2(B))))
    n_blocks = pl.cdiv(B, TB)
    B_pad = n_blocks * TB
    if B_pad != B:
        pad = lambda x: jnp.pad(x, [(0, B_pad - B)] + [(0, 0)] * (x.ndim - 1))
        h, feats, patt = pad(h), pad(feats), pad(patt)
        if use_mask:
            mask = pad(mask)

    in_arrays = [h, patt, feats]
    in_specs = [pl.BlockSpec((TB, R), lambda b: (b, 0)),
                pl.BlockSpec((TB, S, H), lambda b: (b, 0, 0)),
                pl.BlockSpec((TB, S, F), lambda b: (b, 0, 0))]
    if use_mask:
        in_arrays.append(mask)
        in_specs.append(pl.BlockSpec((TB, S), lambda b: (b, 0)))

    # Parameters: replicated across the batch grid; scalar alpha_net bias in SMEM.
    in_arrays += [params["wh"], params["bh"], params["wa"],
                  params["ba"].reshape(1, 1).astype(jnp.float32)]
    in_specs += [pl.BlockSpec((R, H), lambda b: (0, 0)),
                 pl.BlockSpec((1, H), lambda b: (0, 0)),
                 pl.BlockSpec((1, H), lambda b: (0, 0)),
                 pl.BlockSpec(memory_space=pltpu.MemorySpace.SMEM)]

    out_shapes = (jax.ShapeDtypeStruct((B_pad, F), jnp.float32),
                  jax.ShapeDtypeStruct((B_pad, S), jnp.float32))
    out_specs = [pl.BlockSpec((TB, F), lambda b: (b, 0)),
                 pl.BlockSpec((TB, S), lambda b: (b, 0))]

    res, w = pl.pallas_call(
        _attention_kernel(use_mask),
        out_shape=out_shapes,
        grid_spec=pltpu.PrefetchScalarGridSpec(
            num_scalar_prefetch=0,
            grid=(n_blocks,),
            in_specs=in_specs,
            out_specs=out_specs,
        ),
        compiler_params=pltpu.CompilerParams(
            dimension_semantics=("parallel",)),   # shards batch blocks across TCs (v7x)
    )(*in_arrays)

    return res[:B], w[:B]


def attention_reference(h, att_feats, p_att_feats, params, att_masks=None):
    """Pure-JAX reference mirroring the PyTorch code exactly."""
    B = h.shape[0]
    feat_dim = att_feats.shape[-1]
    att_size = int(np.prod(att_feats.shape)) // B // feat_dim
    att_hid = params["wh"].shape[1]

    att = p_att_feats.reshape(-1, att_size, att_hid)
    att_h = h @ params["wh"] + params["bh"]                          # [B, H]
    dot = jnp.tanh(att + att_h[:, None, :])                          # [B, S, H]
    dot = jnp.sum(dot * params["wa"], axis=-1) + params["ba"][0, 0]  # [B, S]
    weight = jax.nn.softmax(dot, axis=1)
    if att_masks is not None:
        weight = weight * att_masks.reshape(-1, att_size)
        weight = weight / (jnp.sum(weight, axis=1, keepdims=True) + 1e-8)
    feats = att_feats.reshape(-1, att_size, feat_dim)
    att_res = jnp.einsum("bs,bsf->bf", weight, feats)
    return att_res, weight


if __name__ == "__main__":
    B, rnn_size, att_hid_size, att_size = 2, 32, 32, 16

    key = jax.random.PRNGKey(0)
    k1, k2, k3, k4, k5, k6, k7 = jax.random.split(key, 7)

    # Deterministic parameter init (nn.Linear(rnn_size, att_hid) / Linear(att_hid, 1)).
    params = {
        "wh": jax.random.normal(k1, (rnn_size, att_hid_size), jnp.float32) * 0.1,
        "bh": jax.random.normal(k2, (1, att_hid_size), jnp.float32) * 0.1,
        "wa": jax.random.normal(k3, (1, att_hid_size), jnp.float32) * 0.1,
        "ba": jax.random.normal(k4, (1, 1), jnp.float32) * 0.1,
    }

    h = jax.random.normal(k5, (B, rnn_size), jnp.float32)
    att_feats = jax.random.normal(k6, (B, att_size, rnn_size), jnp.float32)
    p_att_feats = jax.random.normal(k7, (B, att_size, att_hid_size), jnp.float32)
    att_masks = jnp.concatenate(
        [jnp.ones((B, att_size - 4), jnp.float32),
         jnp.zeros((B, 4), jnp.float32)], axis=1)

    # No-mask path
    res, w = attention_pallas(h, att_feats, p_att_feats, params, None)
    jax.block_until_ready((res, w))
    res_r, w_r = attention_reference(h, att_feats, p_att_feats, params, None)
    np.testing.assert_allclose(np.asarray(res), np.asarray(res_r), rtol=2e-3, atol=1e-4)
    np.testing.assert_allclose(np.asarray(w), np.asarray(w_r), rtol=2e-3, atol=1e-4)

    # Masked path
    res_m, w_m = attention_pallas(h, att_feats, p_att_feats, params, att_masks)
    jax.block_until_ready((res_m, w_m))
    res_mr, w_mr = attention_reference(h, att_feats, p_att_feats, params, att_masks)
    np.testing.assert_allclose(np.asarray(res_m), np.asarray(res_mr), rtol=2e-3, atol=1e-4)
    np.testing.assert_allclose(np.asarray(w_m), np.asarray(w_mr), rtol=2e-3, atol=1e-4)

    print("KERNEL_OK")
</pallas_src>

<mosaic_0001>
module attributes {stable_mosaic.version = 11 : i64} {
  func.func @kernel(%arg0: i32, %arg1: memref<8x32xf32, #tpu.memory_space<vmem>>, %arg2: memref<8x16x32xf32, #tpu.memory_space<vmem>>, %arg3: memref<8x16x32xf32, #tpu.memory_space<vmem>>, %arg4: memref<32x32xf32, #tpu.memory_space<vmem>>, %arg5: memref<1x32xf32, #tpu.memory_space<vmem>>, %arg6: memref<1x32xf32, #tpu.memory_space<vmem>>, %arg7: memref<1x1xf32, #tpu.memory_space<smem>>, %arg8: memref<8x32xf32, #tpu.memory_space<vmem>>, %arg9: memref<8x16xf32, #tpu.memory_space<vmem>>) attributes {dimension_semantics = [#tpu.dimension_semantics<parallel>], iteration_bounds = array<i64: 1>, scalar_prefetch = 0 : i64, scratch_operands = 0 : i64, tpu.core_type = #tpu.core_type<tc>, window_params = [{transform_indices = @transform_0, window_bounds = array<i64: 8, 32>}, {transform_indices = @transform_1, window_bounds = array<i64: 8, 16, 32>}, {transform_indices = @transform_2, window_bounds = array<i64: 8, 16, 32>}, {pipeline_mode = #tpu.pipeline_mode<synchronous>, transform_indices = @transform_3, window_bounds = array<i64: 32, 32>}, {pipeline_mode = #tpu.pipeline_mode<synchronous>, transform_indices = @transform_4, window_bounds = array<i64: 1, 32>}, {pipeline_mode = #tpu.pipeline_mode<synchronous>, transform_indices = @transform_5, window_bounds = array<i64: 1, 32>}, {transform_indices = @transform_6, window_bounds = array<i64: 1, 1>}, {transform_indices = @transform_7, window_bounds = array<i64: 8, 32>}, {transform_indices = @transform_8, window_bounds = array<i64: 8, 16>}]} {
    %c0 = arith.constant 0 : index
    %c0_0 = arith.constant 0 : index
    %0 = vector.load %arg1[%c0, %c0_0] : memref<8x32xf32, #tpu.memory_space<vmem>>, vector<8x32xf32>
    %c0_1 = arith.constant 0 : index
    %c0_2 = arith.constant 0 : index
    %1 = vector.load %arg4[%c0_1, %c0_2] : memref<32x32xf32, #tpu.memory_space<vmem>>, vector<32x32xf32>
    %cst = arith.constant dense<0.000000e+00> : vector<8x32xf32>
    %2 = tpu.matmul %0, %1, %cst {dimension_numbers = #tpu.dot_dimension_numbers<[1], [0], [0], [1], [0, 0, 1, 1], [], []>} : vector<8x32xf32>, vector<32x32xf32>, vector<8x32xf32> -> vector<8x32xf32>
    %c0_3 = arith.constant 0 : index
    %c0_4 = arith.constant 0 : index
    %3 = vector.load %arg5[%c0_3, %c0_4] : memref<1x32xf32, #tpu.memory_space<vmem>>, vector<1x32xf32>
    %4 = vector.broadcast %3 : vector<1x32xf32> to vector<8x32xf32>
    %5 = arith.addf %2, %4 : vector<8x32xf32>
    %c0_5 = arith.constant 0 : index
    %c0_6 = arith.constant 0 : index
    %c0_7 = arith.constant 0 : index
    %6 = vector.load %arg2[%c0_5, %c0_6, %c0_7] : memref<8x16x32xf32, #tpu.memory_space<vmem>>, vector<8x16x32xf32>
    %7 = vector.shape_cast %5 : vector<8x32xf32> to vector<8x1x32xf32>
    %8 = vector.broadcast %7 : vector<8x1x32xf32> to vector<8x16x32xf32>
    %9 = arith.addf %6, %8 : vector<8x16x32xf32>
    %10 = math.tanh %9 : vector<8x16x32xf32>
    %c0_8 = arith.constant 0 : index
    %c0_9 = arith.constant 0 : index
    %11 = vector.load %arg6[%c0_8, %c0_9] : memref<1x32xf32, #tpu.memory_space<vmem>>, vector<1x32xf32>
    %12 = vector.shape_cast %11 : vector<1x32xf32> to vector<1x1x32xf32>
    %13 = vector.broadcast %12 : vector<1x1x32xf32> to vector<8x16x32xf32>
    %14 = arith.mulf %10, %13 : vector<8x16x32xf32>
    %cst_10 = arith.constant dense<0.000000e+00> : vector<8x16xf32>
    %15 = vector.multi_reduction <add>, %14, %cst_10 [2] : vector<8x16x32xf32> to vector<8x16xf32>
    %c0_11 = arith.constant 0 : index
    %c0_12 = arith.constant 0 : index
    %16 = memref.load %arg7[%c0_11, %c0_12] : memref<1x1xf32, #tpu.memory_space<smem>>
    %17 = vector.broadcast %16 : f32 to vector<8x16xf32>
    %18 = arith.addf %15, %17 : vector<8x16xf32>
    %cst_13 = arith.constant dense<0xFF800000> : vector<8xf32>
    %19 = vector.multi_reduction <maximumf>, %18, %cst_13 [1] : vector<8x16xf32> to vector<8xf32>
    %20 = vector.shape_cast %19 : vector<8xf32> to vector<8x1xf32>
    %21 = vector.broadcast %20 : vector<8x1xf32> to vector<8x16xf32>
    %22 = arith.subf %18, %21 : vector<8x16xf32>
    %23 = math.exp %22 : vector<8x16xf32>
    %cst_14 = arith.constant dense<0.000000e+00> : vector<8xf32>
    %24 = vector.multi_reduction <add>, %23, %cst_14 [1] : vector<8x16xf32> to vector<8xf32>
    %25 = vector.shape_cast %24 : vector<8xf32> to vector<8x1xf32>
    %26 = tpu.reciprocal %25 {approx = true} : vector<8x1xf32> -> vector<8x1xf32>
    %27 = vector.broadcast %26 : vector<8x1xf32> to vector<8x16xf32>
    %28 = arith.mulf %23, %27 : vector<8x16xf32>
    %29 = vector.shape_cast %28 : vector<8x16xf32> to vector<8x1x16xf32>
    %c0_15 = arith.constant 0 : index
    %c0_16 = arith.constant 0 : index
    %c0_17 = arith.constant 0 : index
    %30 = vector.load %arg3[%c0_15, %c0_16, %c0_17] : memref<8x16x32xf32, #tpu.memory_space<vmem>>, vector<8x16x32xf32>
    "tpu.trace_start"() <{level = 10 : i32, message = "bks,bsf->bkf"}> : () -> ()
    %cst_18 = arith.constant dense<0.000000e+00> : vector<8x1x32xf32>
    %31 = tpu.matmul %29, %30, %cst_18 {dimension_numbers = #tpu.dot_dimension_numbers<[2], [1], [1], [2], [0, 0, 0, 1, 1, 2], [0], [0]>} : vector<8x1x16xf32>, vector<8x16x32xf32>, vector<8x1x32xf32> -> vector<8x1x32xf32>
    "tpu.trace_stop"() : () -> ()
    %32 = vector.shape_cast %31 : vector<8x1x32xf32> to vector<8x32xf32>
    %c0_19 = arith.constant 0 : index
    %c0_20 = arith.constant 0 : index
    %33 = vector.load %arg8[%c0_19, %c0_20] : memref<8x32xf32, #tpu.memory_space<vmem>>, vector<8x32xf32>
    tpu.vector_store %arg8[%c0_19, %c0_20], %32 {strides = array<i32>} : memref<8x32xf32, #tpu.memory_space<vmem>>, vector<8x32xf32>,
    %c0_21 = arith.constant 0 : index
    %c0_22 = arith.constant 0 : index
    %34 = vector.load %arg9[%c0_21, %c0_22] : memref<8x16xf32, #tpu.memory_space<vmem>>, vector<8x16xf32>
    tpu.vector_store %arg9[%c0_21, %c0_22], %28 {strides = array<i32>} : memref<8x16xf32, #tpu.memory_space<vmem>>, vector<8x16xf32>,
    return
  }
  func.func @transform_0(%arg0: i32) -> (i32, i32) {
    %c0_i32 = arith.constant 0 : i32
    %c0_i32_0 = arith.constant 0 : i32
    return %arg0, %c0_i32 : i32, i32
  }
  func.func @transform_1(%arg0: i32) -> (i32, i32, i32) {
    %c0_i32 = arith.constant 0 : i32
    %c0_i32_0 = arith.constant 0 : i32
    %c0_i32_1 = arith.constant 0 : i32
    return %arg0, %c0_i32, %c0_i32_0 : i32, i32, i32
  }
  func.func @transform_2(%arg0: i32) -> (i32, i32, i32) {
    %c0_i32 = arith.constant 0 : i32
    %c0_i32_0 = arith.constant 0 : i32
    %c0_i32_1 = arith.constant 0 : i32
    return %arg0, %c0_i32, %c0_i32_0 : i32, i32, i32
  }
  func.func @transform_3(%arg0: i32) -> (i32, i32) {
    %c0_i32 = arith.constant 0 : i32
    %c0_i32_0 = arith.constant 0 : i32
    %c0_i32_1 = arith.constant 0 : i32
    return %c0_i32, %c0_i32_0 : i32, i32
  }
  func.func @transform_4(%arg0: i32) -> (i32, i32) {
    %c0_i32 = arith.constant 0 : i32
    %c0_i32_0 = arith.constant 0 : i32
    %c0_i32_1 = arith.constant 0 : i32
    return %c0_i32, %c0_i32_0 : i32, i32
  }
  func.func @transform_5(%arg0: i32) -> (i32, i32) {
    %c0_i32 = arith.constant 0 : i32
    %c0_i32_0 = arith.constant 0 : i32
    %c0_i32_1 = arith.constant 0 : i32
    return %c0_i32, %c0_i32_0 : i32, i32
  }
  func.func @transform_6(%arg0: i32) -> (i32, i32) {
    %c0_i32 = arith.constant 0 : i32
    %c0_i32_0 = arith.constant 0 : i32
    %c0_i32_1 = arith.constant 0 : i32
    return %c0_i32, %c0_i32_0 : i32, i32
  }
  func.func @transform_7(%arg0: i32) -> (i32, i32) {
    %c0_i32 = arith.constant 0 : i32
    %c0_i32_0 = arith.constant 0 : i32
    return %arg0, %c0_i32 : i32, i32
  }
  func.func @transform_8(%arg0: i32) -> (i32, i32) {
    %c0_i32 = arith.constant 0 : i32
    %c0_i32_0 = arith.constant 0 : i32
    return %arg0, %c0_i32 : i32, i32
  }
}

</mosaic_0001>

<llo_original>
// kernel: tpu_custom_call.1
$region0: #{tpu_custom_call.1}
  #allocation0 [shape = 'u32[]', space=smem, size = 0x4, offset = 0x4, fixed_abs, tag = 'smem constant byte address 0x4 - core index']
  #allocation1 [shape = 'u32[72,128]{1,0:T(1,128)}', space=vmem, size = 0x9000, scoped, tag = 'internal scratch']
  #allocation2 [shape = 'f32[1,1]{1,0:T(1,128)S(6)}', space=smem, size = 0x200, scoped, tag = 'scoped memory for tpu_custom_call.1']
  %s0 = inlined_call_operand.hbm [shape: f32[8,32], index: 0, kind: input, shape index: {}]
  %s1 = inlined_call_operand.hbm [shape: f32[8,16,32], index: 1, kind: input, shape index: {}]
  %s2 = inlined_call_operand.hbm [shape: f32[8,16,32], index: 2, kind: input, shape index: {}]
  %s3 = inlined_call_operand.hbm [shape: f32[32,32], index: 3, kind: input, shape index: {}]
  %s4 = inlined_call_operand.vmem [shape: f32[1,32], index: 4, kind: input, shape index: {}]
  %s5 = inlined_call_operand.vmem [shape: f32[1,32], index: 5, kind: input, shape index: {}]
  %s6 = inlined_call_operand.<no memory space> [shape: f32[1,1], index: 6, kind: input, shape index: {}]
  %s7 = inlined_call_operand.hbm [shape: f32[8,32], index: 7, kind: output, shape index: {0}]
  %s8 = inlined_call_operand.hbm [shape: f32[8,16], index: 8, kind: output, shape index: {1}]
  %9 = xla_tuple %s7, %s8
  %s10 = sld [smem:[#allocation0]]
  $region62: #{tpu_custom_call.1} parent=0
    _
  %s12 = ssub.s32 1, %s10
  %s13 = scalar_select 0, %s12, %s10
  %14 = sst [smem:[#allocation2]] %s6
  $region1: #{tpu_custom_call.1} parent=0
    #allocation3 [shape = 'u8[4096]{0}', space=vmem, size = 0x1000, scoped, tag = 'input window, operand 0, single buffered']
    #allocation4 [shape = 's32[1]{0}', space=sflag, size = 0x4, scoped, tag = 'scoped memory for tpu_custom_call.1']
    #allocation5 [shape = 's32[1]{0}', space=sflag, size = 0x4, scoped, tag = 'scoped memory for tpu_custom_call.1']
    #allocation6 [shape = 'u8[65536]{0}', space=vmem, size = 0x10000, scoped, tag = 'input window, operand 1, single buffered']
    #allocation7 [shape = 's32[1]{0}', space=sflag, size = 0x4, scoped, tag = 'scoped memory for tpu_custom_call.1']
    #allocation8 [shape = 'u8[65536]{0}', space=vmem, size = 0x10000, scoped, tag = 'input window, operand 2, single buffered']
    #allocation9 [shape = 'u8[16384]{0}', space=vmem, size = 0x4000, scoped, tag = 'input window, operand 3, single buffered']
    #allocation10 [shape = 's32[1]{0}', space=sflag, size = 0x4, scoped, tag = 'scoped memory for tpu_custom_call.1']
    #allocation11 [shape = 'u8[4096]{0}', space=vmem, size = 0x1000, scoped, tag = 'output window, operand 0, single buffered']
    #allocation12 [shape = 'u8[4096]{0}', space=vmem, size = 0x1000, scoped, tag = 'output window, operand 1, single buffered']
    #allocation13 [shape = 's32[1]{0}', space=sflag, size = 0x4, scoped, tag = 'scoped memory for tpu_custom_call.1']
    %15 = vsyncpa [#allocation4], 0
    %16 = vsyncpa [#allocation7], 0
    %17 = vsyncpa [#allocation10], 0
    %18 = vsyncpa [#allocation5], 0
    %19 = vsyncpa [#allocation13], 0
    // Predicated region
    $region2: #{tpu_custom_call.1} parent=1 // pred_check
      _
    $region3: #{tpu_custom_call.1} parent=1 // pred_check_branch
      %21 = sbr.rel (0) target = $region5
    $region4: #{tpu_custom_call.1} parent=1 // pred_region
      %23 = vsyncadd [#allocation4], 0
      %s25 = sshll.u32 %s0, 4
      %s26 = int_to_ptr.hbm [resolvable:$true] %s25
      %s27 = sshll.u32 [#allocation3], 4
      %s28 = int_to_ptr.vmem [resolvable:$true] %s27
      %30 = dma.hbm_to_vmem [thread:$0]  %s26, 128, %s28, [#allocation4]
    $region5: #{tpu_custom_call.1} parent=1 // pred_fallthru
      _
    // Predicated region
    $region6: #{tpu_custom_call.1} parent=1 // pred_check
      _
    $region7: #{tpu_custom_call.1} parent=1 // pred_check_branch
      %32 = sbr.rel (0) target = $region9
    $region8: #{tpu_custom_call.1} parent=1 // pred_region
      %34 = vsyncadd [#allocation7], 0
      %s35 = sshll.u32 %s1, 4
      %s36 = int_to_ptr.hbm [resolvable:$true] %s35
      %s37 = sshll.u32 [#allocation6], 4
      %s38 = int_to_ptr.vmem [resolvable:$true] %s37
      %43 = dma.hbm_to_vmem [thread:$0]  %s36, 2048, %s38, [#allocation7], 128, 128, 8
    $region9: #{tpu_custom_call.1} parent=1 // pred_fallthru
      _
    // Predicated region
    $region10: #{tpu_custom_call.1} parent=1 // pred_check
      _
    $region11: #{tpu_custom_call.1} parent=1 // pred_check_branch
      %45 = sbr.rel (0) target = $region13
    $region12: #{tpu_custom_call.1} parent=1 // pred_region
      %47 = vsyncadd [#allocation7], 0
      %s48 = sshll.u32 %s2, 4
      %s49 = int_to_ptr.hbm [resolvable:$true] %s48
      %s50 = sshll.u32 [#allocation8], 4
      %s51 = int_to_ptr.vmem [resolvable:$true] %s50
      %56 = dma.hbm_to_vmem [thread:$0]  %s49, 2048, %s51, [#allocation7], 128, 128, 8
    $region13: #{tpu_custom_call.1} parent=1 // pred_fallthru
      _
    // Predicated region
    $region14: #{tpu_custom_call.1} parent=1 // pred_check
      _
    $region15: #{tpu_custom_call.1} parent=1 // pred_check_branch
      %58 = sbr.rel (0) target = $region17
    $region16: #{tpu_custom_call.1} parent=1 // pred_region
      %60 = vsyncadd [#allocation10], 0
      %s61 = sshll.u32 %s3, 4
      %s62 = int_to_ptr.hbm [resolvable:$true] %s61
      %s63 = sshll.u32 [#allocation9], 4
      %s64 = int_to_ptr.vmem [resolvable:$true] %s63
      %69 = dma.hbm_to_vmem [thread:$0]  %s62, 512, %s64, [#allocation10], 128, 128, 8
    $region17: #{tpu_custom_call.1} parent=1 // pred_fallthru
      _
    // Predicated region
    $region18: #{tpu_custom_call.1} parent=1 // pred_check
      _
    $region19: #{tpu_custom_call.1} parent=1 // pred_check_branch
      %71 = sbr.rel (0) target = $region21
    $region20: #{tpu_custom_call.1} parent=1 // pred_region
      _
    $region21: #{tpu_custom_call.1} parent=1 // pred_fallthru
      _
    // Predicated region
    $region22: #{tpu_custom_call.1} parent=1 // pred_check
      _
    $region23: #{tpu_custom_call.1} parent=1 // pred_check_branch
      %73 = sbr.rel (0) target = $region25
    $region24: #{tpu_custom_call.1} parent=1 // pred_region
      _
    $region25: #{tpu_custom_call.1} parent=1 // pred_fallthru
      _
    // Predicated region
    $region26: #{tpu_custom_call.1} parent=1 // pred_check
      _
    $region27: #{tpu_custom_call.1} parent=1 // pred_check_branch
      %75 = sbr.rel (0) target = $region29
    $region28: #{tpu_custom_call.1} parent=1 // pred_region
      _
    $region29: #{tpu_custom_call.1} parent=1 // pred_fallthru
      _
    // Predicated region
    $region30: #{tpu_custom_call.1} parent=1 // pred_check
      _
    $region31: #{tpu_custom_call.1} parent=1 // pred_check_branch
      %77 = sbr.rel (0) target = $region33
    $region32: #{tpu_custom_call.1} parent=1 // pred_region
      %79 = dma.done [#allocation4], 128
    $region33: #{tpu_custom_call.1} parent=1 // pred_fallthru
      _
    // Predicated region
    $region34: #{tpu_custom_call.1} parent=1 // pred_check
      _
    $region35: #{tpu_custom_call.1} parent=1 // pred_check_branch
      %81 = sbr.rel (0) target = $region37
    $region36: #{tpu_custom_call.1} parent=1 // pred_region
      %83 = dma.done [#allocation7], 2048
    $region37: #{tpu_custom_call.1} parent=1 // pred_fallthru
      _
    // Predicated region
    $region38: #{tpu_custom_call.1} parent=1 // pred_check
      _
    $region39: #{tpu_custom_call.1} parent=1 // pred_check_branch
      %85 = sbr.rel (0) target = $region41
    $region40: #{tpu_custom_call.1} parent=1 // pred_region
      %87 = dma.done [#allocation7], 2048
    $region41: #{tpu_custom_call.1} parent=1 // pred_fallthru
      _
    // Predicated region
    $region42: #{tpu_custom_call.1} parent=1 // pred_check
      _
    $region43: #{tpu_custom_call.1} parent=1 // pred_check_branch
      %89 = sbr.rel (0) target = $region45
    $region44: #{tpu_custom_call.1} parent=1 // pred_region
      %91 = dma.done [#allocation10], 512
    $region45: #{tpu_custom_call.1} parent=1 // pred_fallthru
      _
    %v92 = vld [vmem:[#allocation3] sm:$0xff]
    %v93 = vld [vmem:[#allocation9] sm:$0xff]
    %v94 = vld [vmem:[#allocation9 + $0x8] sm:$0xff]
    %v95 = vld [vmem:[#allocation9 + $0x10] sm:$0xff]
    %v96 = vld [vmem:[#allocation9 + $0x18] sm:$0xff]
    %v97 = vld [vmem:[%s4] sm:$0x1]
    %v99 = vperm.slane %v97, 0
    %vm101 = vcmask 261120
    %v103 = vsel %vm101, %v92, 0
    %105 = vmatpush.msra.mxu0 0.0
    %106 = vmatpush.msra.mxu0 0.0
    %107 = vmatpush.msra.mxu0 0.0
    %108 = vmatpush.msra.mxu0 0.0
    %109 = vmatpush.msra.mxu0 0.0
    %110 = vmatpush.msra.mxu0 0.0
    %111 = vmatpush.msra.mxu0 0.0
    %112 = vmatpush.msra.mxu0 0.0
    %113 = vmatpush.msra.mxu0 0.0
    %114 = vmatpush.msra.mxu0 0.0
    %115 = vmatpush.msra.mxu0 0.0
    %116 = vmatpush.msra.mxu0 0.0
    %117 = vmatpush.msra.mxu0 %v96
    %118 = vmatpush.msra.mxu0 %v95
    %119 = vmatpush.msra.mxu0 %v94
    %120 = vmatpush.msra.mxu0 %v93
    %121 = vmatmul.f32.gmra.mxu0 %v103
    %v122 = vpop.f32.mrf.mxu0
    %v123 = vadd.f32 %v99, %v122
    %124 = vdwg.mxu0
    %v125 = vld [vmem:[#allocation6] sm:$0xff]
    %v126 = vld [vmem:[#allocation6 + $0x8] sm:$0xff]
    %v127 = vld [vmem:[#allocation6 + $0x10] sm:$0xff]
    %v128 = vld [vmem:[#allocation6 + $0x18] sm:$0xff]
    %v129 = vld [vmem:[#allocation6 + $0x20] sm:$0xff]
    %v130 = vld [vmem:[#allocation6 + $0x28] sm:$0xff]
    %v131 = vld [vmem:[#allocation6 + $0x30] sm:$0xff]
    %v132 = vld [vmem:[#allocation6 + $0x38] sm:$0xff]
    %v133 = vld [vmem:[#allocation6 + $0x40] sm:$0xff]
    %v134 = vld [vmem:[#allocation6 + $0x48] sm:$0xff]
    %v135 = vld [vmem:[#allocation6 + $0x50] sm:$0xff]
    %v136 = vld [vmem:[#allocation6 + $0x58] sm:$0xff]
    %v137 = vld [vmem:[#allocation6 + $0x60] sm:$0xff]
    %v138 = vld [vmem:[#allocation6 + $0x68] sm:$0xff]
    %v139 = vld [vmem:[#allocation6 + $0x70] sm:$0xff]
    %v140 = vld [vmem:[#allocation6 + $0x78] sm:$0xff]
    %v142 = vrot.slane %v123, 1
    %v143 = vrot.slane %v123, 2
    %v144 = vrot.slane %v123, 3
    %v145 = vrot.slane %v123, 4
    %v146 = vrot.slane %v123, 5
    %v147 = vrot.slane %v123, 6
    %v148 = vrot.slane %v123, 7
    %v149 = vperm.slane %v123, 0
    %v150 = vperm.slane %v142, 0
    %v151 = vperm.slane %v143, 0
    %v152 = vperm.slane %v144, 0
    %v153 = vperm.slane %v145, 0
    %v154 = vperm.slane %v146, 0
    %v155 = vperm.slane %v147, 0
    %v156 = vperm.slane %v148, 0
    %v165 = vadd.f32 %v125, %v149
    %v166 = vadd.f32 %v126, %v149
    %v167 = vadd.f32 %v127, %v150
    %v168 = vadd.f32 %v128, %v150
    %v169 = vadd.f32 %v129, %v151
    %v170 = vadd.f32 %v130, %v151
    %v171 = vadd.f32 %v131, %v152
    %v172 = vadd.f32 %v132, %v152
    %v173 = vadd.f32 %v133, %v153
    %v174 = vadd.f32 %v134, %v153
    %v175 = vadd.f32 %v135, %v154
    %v176 = vadd.f32 %v136, %v154
    %v177 = vadd.f32 %v137, %v155
    %v178 = vadd.f32 %v138, %v155
    %v179 = vadd.f32 %v139, %v156
    %v180 = vadd.f32 %v140, %v156
    %v181 = vtanh.pop %v165
    %v182 = vtanh.pop %v166
    %v183 = vtanh.pop %v167
    %v184 = vtanh.pop %v168
    %v185 = vtanh.pop %v169
    %v186 = vtanh.pop %v170
    %v187 = vtanh.pop %v171
    %v188 = vtanh.pop %v172
    %v189 = vtanh.pop %v173
    %v190 = vtanh.pop %v174
    %v191 = vtanh.pop %v175
    %v192 = vtanh.pop %v176
    %v193 = vtanh.pop %v177
    %v194 = vtanh.pop %v178
    %v195 = vtanh.pop %v179
    %v196 = vtanh.pop %v180
    %v197 = vld [vmem:[%s5] sm:$0x1]
    %v199 = vperm.slane %v197, 0
    %v201 = vmul.f32 %v181, %v199
    %v202 = vmul.f32 %v182, %v199
    %v203 = vmul.f32 %v183, %v199
    %v204 = vmul.f32 %v184, %v199
    %v205 = vmul.f32 %v185, %v199
    %v206 = vmul.f32 %v186, %v199
    %v207 = vmul.f32 %v187, %v199
    %v208 = vmul.f32 %v188, %v199
    %v209 = vmul.f32 %v189, %v199
    %v210 = vmul.f32 %v190, %v199
    %v211 = vmul.f32 %v191, %v199
    %v212 = vmul.f32 %v192, %v199
    %v213 = vmul.f32 %v193, %v199
    %v214 = vmul.f32 %v194, %v199
    %v215 = vmul.f32 %v195, %v199
    %v216 = vmul.f32 %v196, %v199
    %v217 = vsel %vm101, %v201, 0.0
    %218 = vadd.xlane.f32.xlu0 %v217
    %v219 = vpop.xlane.xlu0 %218
    %v220 = vsel %vm101, %v202, 0.0
    %221 = vadd.xlane.f32.xlu0 %v220
    %v222 = vpop.xlane.xlu0 %221
    %v223 = vsel %vm101, %v203, 0.0
    %224 = vadd.xlane.f32.xlu0 %v223
    %v225 = vpop.xlane.xlu0 %224
    %v226 = vsel %vm101, %v204, 0.0
    %227 = vadd.xlane.f32.xlu0 %v226
    %v228 = vpop.xlane.xlu0 %227
    %v229 = vsel %vm101, %v205, 0.0
    %230 = vadd.xlane.f32.xlu0 %v229
    %v231 = vpop.xlane.xlu0 %230
    %v232 = vsel %vm101, %v206, 0.0
    %233 = vadd.xlane.f32.xlu0 %v232
    %v234 = vpop.xlane.xlu0 %233
    %v235 = vsel %vm101, %v207, 0.0
    %236 = vadd.xlane.f32.xlu0 %v235
    %v237 = vpop.xlane.xlu0 %236
    %v238 = vsel %vm101, %v208, 0.0
    %239 = vadd.xlane.f32.xlu0 %v238
    %v240 = vpop.xlane.xlu0 %239
    %v241 = vsel %vm101, %v209, 0.0
    %242 = vadd.xlane.f32.xlu0 %v241
    %v243 = vpop.xlane.xlu0 %242
    %v244 = vsel %vm101, %v210, 0.0
    %245 = vadd.xlane.f32.xlu0 %v244
    %v246 = vpop.xlane.xlu0 %245
    %v247 = vsel %vm101, %v211, 0.0
    %248 = vadd.xlane.f32.xlu0 %v247
    %v249 = vpop.xlane.xlu0 %248
    %v250 = vsel %vm101, %v212, 0.0
    %251 = vadd.xlane.f32.xlu0 %v250
    %v252 = vpop.xlane.xlu0 %251
    %v253 = vsel %vm101, %v213, 0.0
    %254 = vadd.xlane.f32.xlu0 %v253
    %v255 = vpop.xlane.xlu0 %254
    %v256 = vsel %vm101, %v214, 0.0
    %257 = vadd.xlane.f32.xlu0 %v256
    %v258 = vpop.xlane.xlu0 %257
    %v259 = vsel %vm101, %v215, 0.0
    %260 = vadd.xlane.f32.xlu0 %v259
    %v261 = vpop.xlane.xlu0 %260
    %v262 = vsel %vm101, %v216, 0.0
    %263 = vadd.xlane.f32.xlu0 %v262
    %v264 = vpop.xlane.xlu0 %263
    %s265 = sld [smem:[#allocation2]]
    %v266 = vstv %s265
    %v267 = vadd.f32 %v219, %v266
    %v268 = vadd.f32 %v222, %v266
    %v269 = vadd.f32 %v225, %v266
    %v270 = vadd.f32 %v228, %v266
    %v271 = vadd.f32 %v231, %v266
    %v272 = vadd.f32 %v234, %v266
    %v273 = vadd.f32 %v237, %v266
    %v274 = vadd.f32 %v240, %v266
    %v275 = vadd.f32 %v243, %v266
    %v276 = vadd.f32 %v246, %v266
    %v277 = vadd.f32 %v249, %v266
    %v278 = vadd.f32 %v252, %v266
    %v279 = vadd.f32 %v255, %v266
    %v280 = vadd.f32 %v258, %v266
    %v281 = vadd.f32 %v261, %v266
    %v282 = vadd.f32 %v264, %v266
    %v299 = vlaneseq
    %v300 = vand.u32 %v299, 127
    %v301 = vperm.slane %v267, %v300
    %v302 = vadd.s32 %v300, 4294967288
    %v303 = vperm.slane %v268, %v302
    %vm304 = vcmask 130112
    %v305 = vsel %vm304, %v303, %v301
    %v306 = vperm.slane %v269, %v300
    %v307 = vperm.slane %v270, %v302
    %v308 = vsel %vm304, %v307, %v306
    %v309 = vperm.slane %v271, %v300
    %v310 = vperm.slane %v272, %v302
    %v311 = vsel %vm304, %v310, %v309
    %v312 = vperm.slane %v273, %v300
    %v313 = vperm.slane %v274, %v302
    %v314 = vsel %vm304, %v313, %v312
    %v315 = vperm.slane %v275, %v300
    %v316 = vperm.slane %v276, %v302
    %v317 = vsel %vm304, %v316, %v315
    %v318 = vperm.slane %v277, %v300
    %v319 = vperm.slane %v278, %v302
    %v320 = vsel %vm304, %v319, %v318
    %v321 = vperm.slane %v279, %v300
    %v322 = vperm.slane %v280, %v302
    %v323 = vsel %vm304, %v322, %v321
    %v324 = vperm.slane %v281, %v300
    %v325 = vperm.slane %v282, %v302
    %v326 = vsel %vm304, %v325, %v324
    %vm327 = vcmask 1041409
    %v328 = vsel %vm327, %v308, %v305
    %vm329 = vcmask 1042434
    %v330 = vsel %vm329, %v311, %v328
    %vm331 = vcmask 1043459
    %v332 = vsel %vm331, %v314, %v330
    %vm333 = vcmask 1044484
    %v334 = vsel %vm333, %v317, %v332
    %vm335 = vcmask 1045509
    %v336 = vsel %vm335, %v320, %v334
    %vm337 = vcmask 1046534
    %v338 = vsel %vm337, %v323, %v336
    %vm339 = vcmask 1047559
    %v340 = vsel %vm339, %v326, %v338
    %vm342 = vcmask 130048
    %v343 = vsel %vm342, %v340, -inf
    %344 = vmax.xlane.f32.xlu0 %v343
    %v345 = vpop.xlane.xlu0 %344
    %v347 = vperm.slane %v345, 0
    %v348 = vperm.slane %v345, 1
    %v349 = vperm.slane %v345, 2
    %v350 = vperm.slane %v345, 3
    %v351 = vperm.slane %v345, 4
    %v352 = vperm.slane %v345, 5
    %v353 = vperm.slane %v345, 6
    %v354 = vperm.slane %v345, 7
    %v363 = vsub.f32 %v267, %v347
    %v364 = vsub.f32 %v268, %v347
    %v365 = vsub.f32 %v269, %v348
    %v366 = vsub.f32 %v270, %v348
    %v367 = vsub.f32 %v271, %v349
    %v368 = vsub.f32 %v272, %v349
    %v369 = vsub.f32 %v273, %v350
    %v370 = vsub.f32 %v274, %v350
    %v371 = vsub.f32 %v275, %v351
    %v372 = vsub.f32 %v276, %v351
    %v373 = vsub.f32 %v277, %v352
    %v374 = vsub.f32 %v278, %v352
    %v375 = vsub.f32 %v279, %v353
    %v376 = vsub.f32 %v280, %v353
    %v377 = vsub.f32 %v281, %v354
    %v378 = vsub.f32 %v282, %v354
    %v379 = vmul.f32 %v363, 1.442695
    %v380 = vpow.pop %v379
    %v381 = vmul.f32 %v364, 1.442695
    %v382 = vpow.pop %v381
    %v383 = vmul.f32 %v365, 1.442695
    %v384 = vpow.pop %v383
    %v385 = vmul.f32 %v366, 1.442695
    %v386 = vpow.pop %v385
    %v387 = vmul.f32 %v367, 1.442695
    %v388 = vpow.pop %v387
    %v389 = vmul.f32 %v368, 1.442695
    %v390 = vpow.pop %v389
    %v391 = vmul.f32 %v369, 1.442695
    %v392 = vpow.pop %v391
    %v393 = vmul.f32 %v370, 1.442695
    %v394 = vpow.pop %v393
    %v395 = vmul.f32 %v371, 1.442695
    %v396 = vpow.pop %v395
    %v397 = vmul.f32 %v372, 1.442695
    %v398 = vpow.pop %v397
    %v399 = vmul.f32 %v373, 1.442695
    %v400 = vpow.pop %v399
    %v401 = vmul.f32 %v374, 1.442695
    %v402 = vpow.pop %v401
    %v403 = vmul.f32 %v375, 1.442695
    %v404 = vpow.pop %v403
    %v405 = vmul.f32 %v376, 1.442695
    %v406 = vpow.pop %v405
    %v407 = vmul.f32 %v377, 1.442695
    %v408 = vpow.pop %v407
    %v409 = vmul.f32 %v378, 1.442695
    %v410 = vpow.pop %v409
    %427 = vset.pattern.permute.xlu0 0
    %428 = vperm.xlu0 %427, %v380
    %v429 = vpop.permute.xlu0 %428
    %430 = vset.pattern.permute.xlu0 0
    %431 = vperm.xlu0 %430, %v382
    %v432 = vpop.permute.xlu0 %431
    %433 = vset.pattern.permute.xlu0 0
    %434 = vperm.xlu0 %433, %v384
    %v435 = vpop.permute.xlu0 %434
    %436 = vset.pattern.permute.xlu0 0
    %437 = vperm.xlu0 %436, %v386
    %v438 = vpop.permute.xlu0 %437
    %439 = vset.pattern.permute.xlu0 0
    %440 = vperm.xlu0 %439, %v388
    %v441 = vpop.permute.xlu0 %440
    %442 = vset.pattern.permute.xlu0 0
    %443 = vperm.xlu0 %442, %v390
    %v444 = vpop.permute.xlu0 %443
    %445 = vset.pattern.permute.xlu0 0
    %446 = vperm.xlu0 %445, %v392
    %v447 = vpop.permute.xlu0 %446
    %448 = vset.pattern.permute.xlu0 0
    %449 = vperm.xlu0 %448, %v394
    %v450 = vpop.permute.xlu0 %449
    %451 = vset.pattern.permute.xlu0 0
    %452 = vperm.xlu0 %451, %v396
    %v453 = vpop.permute.xlu0 %452
    %454 = vset.pattern.permute.xlu0 0
    %455 = vperm.xlu0 %454, %v398
    %v456 = vpop.permute.xlu0 %455
    %457 = vset.pattern.permute.xlu0 0
    %458 = vperm.xlu0 %457, %v400
    %v459 = vpop.permute.xlu0 %458
    %460 = vset.pattern.permute.xlu0 0
    %461 = vperm.xlu0 %460, %v402
    %v462 = vpop.permute.xlu0 %461
    %463 = vset.pattern.permute.xlu0 0
    %464 = vperm.xlu0 %463, %v404
    %v465 = vpop.permute.xlu0 %464
    %466 = vset.pattern.permute.xlu0 0
    %467 = vperm.xlu0 %466, %v406
    %v468 = vpop.permute.xlu0 %467
    %469 = vset.pattern.permute.xlu0 0
    %470 = vperm.xlu0 %469, %v408
    %v471 = vpop.permute.xlu0 %470
    %472 = vset.pattern.permute.xlu0 0
    %473 = vperm.xlu0 %472, %v410
    %v474 = vpop.permute.xlu0 %473
    %v475 = vperm.slane %v429, %v300
    %v476 = vperm.slane %v432, %v302
    %v477 = vsel %vm304, %v476, %v475
    %v478 = vperm.slane %v435, %v300
    %v479 = vperm.slane %v438, %v302
    %v480 = vsel %vm304, %v479, %v478
    %v481 = vperm.slane %v441, %v300
    %v482 = vperm.slane %v444, %v302
    %v483 = vsel %vm304, %v482, %v481
    %v484 = vperm.slane %v447, %v300
    %v485 = vperm.slane %v450, %v302
    %v486 = vsel %vm304, %v485, %v484
    %v487 = vperm.slane %v453, %v300
    %v488 = vperm.slane %v456, %v302
    %v489 = vsel %vm304, %v488, %v487
    %v490 = vperm.slane %v459, %v300
    %v491 = vperm.slane %v462, %v302
    %v492 = vsel %vm304, %v491, %v490
    %v493 = vperm.slane %v465, %v300
    %v494 = vperm.slane %v468, %v302
    %v495 = vsel %vm304, %v494, %v493
    %v496 = vperm.slane %v471, %v300
    %v497 = vperm.slane %v474, %v302
    %v498 = vsel %vm304, %v497, %v496
    %v499 = vsel %vm327, %v480, %v477
    %v500 = vsel %vm329, %v483, %v499
    %v501 = vsel %vm331, %v486, %v500
    %v502 = vsel %vm333, %v489, %v501
    %v503 = vsel %vm335, %v492, %v502
    %v504 = vsel %vm337, %v495, %v503
    %v505 = vsel %vm339, %v498, %v504
    %v507 = vsel %vm342, %v505, 0.0
    %508 = vadd.xlane.f32.xlu0 %v507
    %v509 = vpop.xlane.xlu0 %508
    %v510 = vrcp.pop %v509
    %v512 = vperm.slane %v510, 0
    %v513 = vperm.slane %v510, 1
    %v514 = vperm.slane %v510, 2
    %v515 = vperm.slane %v510, 3
    %v516 = vperm.slane %v510, 4
    %v517 = vperm.slane %v510, 5
    %v518 = vperm.slane %v510, 6
    %v519 = vperm.slane %v510, 7
    %v528 = vmul.f32 %v380, %v512
    %v529 = vmul.f32 %v382, %v512
    %v530 = vmul.f32 %v384, %v513
    %v531 = vmul.f32 %v386, %v513
    %v532 = vmul.f32 %v388, %v514
    %v533 = vmul.f32 %v390, %v514
    %v534 = vmul.f32 %v392, %v515
    %v535 = vmul.f32 %v394, %v515
    %v536 = vmul.f32 %v396, %v516
    %v537 = vmul.f32 %v398, %v516
    %v538 = vmul.f32 %v400, %v517
    %v539 = vmul.f32 %v402, %v517
    %v540 = vmul.f32 %v404, %v518
    %v541 = vmul.f32 %v406, %v518
    %v542 = vmul.f32 %v408, %v519
    %v543 = vmul.f32 %v410, %v519
    %v544 = vld [vmem:[#allocation8] sm:$0xff]
    %v545 = vld [vmem:[#allocation8 + $0x8] sm:$0xff]
    %v546 = vld [vmem:[#allocation8 + $0x10] sm:$0xff]
    %v547 = vld [vmem:[#allocation8 + $0x18] sm:$0xff]
    %v548 = vld [vmem:[#allocation8 + $0x20] sm:$0xff]
    %v549 = vld [vmem:[#allocation8 + $0x28] sm:$0xff]
    %v550 = vld [vmem:[#allocation8 + $0x30] sm:$0xff]
    %v551 = vld [vmem:[#allocation8 + $0x38] sm:$0xff]
    %v552 = vld [vmem:[#allocation8 + $0x40] sm:$0xff]
    %v553 = vld [vmem:[#allocation8 + $0x48] sm:$0xff]
    %v554 = vld [vmem:[#allocation8 + $0x50] sm:$0xff]
    %v555 = vld [vmem:[#allocation8 + $0x58] sm:$0xff]
    %v556 = vld [vmem:[#allocation8 + $0x60] sm:$0xff]
    %v557 = vld [vmem:[#allocation8 + $0x68] sm:$0xff]
    %v558 = vld [vmem:[#allocation8 + $0x70] sm:$0xff]
    %v559 = vld [vmem:[#allocation8 + $0x78] sm:$0xff]
    %562 = vset.pattern.permute.xlu0 0
    %563 = vperm.xlu0 %562, %v528
    %v564 = vpop.permute.xlu0 %563
    %565 = vset.pattern.permute.xlu0 0
    %566 = vperm.xlu0 %565, %v529
    %v567 = vpop.permute.xlu0 %566
    %v568 = vperm.slane %v564, %v300
    %v569 = vperm.slane %v567, %v302
    %v570 = vsel %vm304, %v569, %v568
    %v571 = vsel %vm342, %v570, 0
    %573 = vmatpush.msra.mxu0 0.0
    %574 = vmatpush.msra.mxu0 0.0
    %575 = vmatpush.msra.mxu0 0.0
    %576 = vmatpush.msra.mxu0 0.0
    %577 = vmatpush.msra.mxu0 0.0
    %578 = vmatpush.msra.mxu0 0.0
    %579 = vmatpush.msra.mxu0 0.0
    %580 = vmatpush.msra.mxu0 0.0
    %581 = vmatpush.msra.mxu0 0.0
    %582 = vmatpush.msra.mxu0 0.0
    %583 = vmatpush.msra.mxu0 0.0
    %584 = vmatpush.msra.mxu0 0.0
    %585 = vmatpush.msra.mxu0 0.0
    %586 = vmatpush.msra.mxu0 0.0
    %587 = vmatpush.msra.mxu0 %v545
    %588 = vmatpush.msra.mxu0 %v544
    %589 = vmatmul.f32.gmra.mxu0 %v571
    %v590 = vpop.f32.mrf.mxu0
    %v591 = vadd.f32 0.0, %v590
    %592 = vdwg.mxu0
    %595 = vset.pattern.permute.xlu0 0
    %596 = vperm.xlu0 %595, %v530
    %v597 = vpop.permute.xlu0 %596
    %598 = vset.pattern.permute.xlu0 0
    %599 = vperm.xlu0 %598, %v531
    %v600 = vpop.permute.xlu0 %599
    %v601 = vperm.slane %v597, %v300
    %v602 = vperm.slane %v600, %v302
    %v603 = vsel %vm304, %v602, %v601
    %v604 = vsel %vm342, %v603, 0
    %606 = vmatpush.msra.mxu0 0.0
    %607 = vmatpush.msra.mxu0 0.0
    %608 = vmatpush.msra.mxu0 0.0
    %609 = vmatpush.msra.mxu0 0.0
    %610 = vmatpush.msra.mxu0 0.0
    %611 = vmatpush.msra.mxu0 0.0
    %612 = vmatpush.msra.mxu0 0.0
    %613 = vmatpush.msra.mxu0 0.0
    %614 = vmatpush.msra.mxu0 0.0
    %615 = vmatpush.msra.mxu0 0.0
    %616 = vmatpush.msra.mxu0 0.0
    %617 = vmatpush.msra.mxu0 0.0
    %618 = vmatpush.msra.mxu0 0.0
    %619 = vmatpush.msra.mxu0 0.0
    %620 = vmatpush.msra.mxu0 %v547
    %621 = vmatpush.msra.mxu0 %v546
    %622 = vmatmul.f32.gmra.mxu0 %v604
    %v623 = vpop.f32.mrf.mxu0
    %v624 = vadd.f32 0.0, %v623
    %625 = vdwg.mxu0
    %628 = vset.pattern.permute.xlu0 0
    %629 = vperm.xlu0 %628, %v532
    %v630 = vpop.permute.xlu0 %629
    %631 = vset.pattern.permute.xlu0 0
    %632 = vperm.xlu0 %631, %v533
    %v633 = vpop.permute.xlu0 %632
    %v634 = vperm.slane %v630, %v300
    %v635 = vperm.slane %v633, %v302
    %v636 = vsel %vm304, %v635, %v634
    %v637 = vsel %vm342, %v636, 0
    %639 = vmatpush.msra.mxu0 0.0
    %640 = vmatpush.msra.mxu0 0.0
    %641 = vmatpush.msra.mxu0 0.0
    %642 = vmatpush.msra.mxu0 0.0
    %643 = vmatpush.msra.mxu0 0.0
    %644 = vmatpush.msra.mxu0 0.0
    %645 = vmatpush.msra.mxu0 0.0
    %646 = vmatpush.msra.mxu0 0.0
    %647 = vmatpush.msra.mxu0 0.0
    %648 = vmatpush.msra.mxu0 0.0
    %649 = vmatpush.msra.mxu0 0.0
    %650 = vmatpush.msra.mxu0 0.0
    %651 = vmatpush.msra.mxu0 0.0
    %652 = vmatpush.msra.mxu0 0.0
    %653 = vmatpush.msra.mxu0 %v549
    %654 = vmatpush.msra.mxu0 %v548
    %655 = vmatmul.f32.gmra.mxu0 %v637
    %v656 = vpop.f32.mrf.mxu0
    %v657 = vadd.f32 0.0, %v656
    %658 = vdwg.mxu0
    %661 = vset.pattern.permute.xlu0 0
    %662 = vperm.xlu0 %661, %v534
    %v663 = vpop.permute.xlu0 %662
    %664 = vset.pattern.permute.xlu0 0
    %665 = vperm.xlu0 %664, %v535
    %v666 = vpop.permute.xlu0 %665
    %v667 = vperm.slane %v663, %v300
    %v668 = vperm.slane %v666, %v302
    %v669 = vsel %vm304, %v668, %v667
    %v670 = vsel %vm342, %v669, 0
    %672 = vmatpush.msra.mxu0 0.0
    %673 = vmatpush.msra.mxu0 0.0
    %674 = vmatpush.msra.mxu0 0.0
    %675 = vmatpush.msra.mxu0 0.0
    %676 = vmatpush.msra.mxu0 0.0
    %677 = vmatpush.msra.mxu0 0.0
    %678 = vmatpush.msra.mxu0 0.0
    %679 = vmatpush.msra.mxu0 0.0
    %680 = vmatpush.msra.mxu0 0.0
    %681 = vmatpush.msra.mxu0 0.0
    %682 = vmatpush.msra.mxu0 0.0
    %683 = vmatpush.msra.mxu0 0.0
    %684 = vmatpush.msra.mxu0 0.0
    %685 = vmatpush.msra.mxu0 0.0
    %686 = vmatpush.msra.mxu0 %v551
    %687 = vmatpush.msra.mxu0 %v550
    %688 = vmatmul.f32.gmra.mxu0 %v670
    %v689 = vpop.f32.mrf.mxu0
    %v690 = vadd.f32 0.0, %v689
    %691 = vdwg.mxu0
    %694 = vset.pattern.permute.xlu0 0
    %695 = vperm.xlu0 %694, %v536
    %v696 = vpop.permute.xlu0 %695
    %697 = vset.pattern.permute.xlu0 0
    %698 = vperm.xlu0 %697, %v537
    %v699 = vpop.permute.xlu0 %698
    %v700 = vperm.slane %v696, %v300
    %v701 = vperm.slane %v699, %v302
    %v702 = vsel %vm304, %v701, %v700
    %v703 = vsel %vm342, %v702, 0
    %705 = vmatpush.msra.mxu0 0.0
    %706 = vmatpush.msra.mxu0 0.0
    %707 = vmatpush.msra.mxu0 0.0
    %708 = vmatpush.msra.mxu0 0.0
    %709 = vmatpush.msra.mxu0 0.0
    %710 = vmatpush.msra.mxu0 0.0
    %711 = vmatpush.msra.mxu0 0.0
    %712 = vmatpush.msra.mxu0 0.0
    %713 = vmatpush.msra.mxu0 0.0
    %714 = vmatpush.msra.mxu0 0.0
    %715 = vmatpush.msra.mxu0 0.0
    %716 = vmatpush.msra.mxu0 0.0
    %717 = vmatpush.msra.mxu0 0.0
    %718 = vmatpush.msra.mxu0 0.0
    %719 = vmatpush.msra.mxu0 %v553
    %720 = vmatpush.msra.mxu0 %v552
    %721 = vmatmul.f32.gmra.mxu0 %v703
    %v722 = vpop.f32.mrf.mxu0
    %v723 = vadd.f32 0.0, %v722
    %724 = vdwg.mxu0
    %727 = vset.pattern.permute.xlu0 0
    %728 = vperm.xlu0 %727, %v538
    %v729 = vpop.permute.xlu0 %728
    %730 = vset.pattern.permute.xlu0 0
    %731 = vperm.xlu0 %730, %v539
    %v732 = vpop.permute.xlu0 %731
    %v733 = vperm.slane %v729, %v300
    %v734 = vperm.slane %v732, %v302
    %v735 = vsel %vm304, %v734, %v733
    %v736 = vsel %vm342, %v735, 0
    %738 = vmatpush.msra.mxu0 0.0
    %739 = vmatpush.msra.mxu0 0.0
    %740 = vmatpush.msra.mxu0 0.0
    %741 = vmatpush.msra.mxu0 0.0
    %742 = vmatpush.msra.mxu0 0.0
    %743 = vmatpush.msra.mxu0 0.0
    %744 = vmatpush.msra.mxu0 0.0
    %745 = vmatpush.msra.mxu0 0.0
    %746 = vmatpush.msra.mxu0 0.0
    %747 = vmatpush.msra.mxu0 0.0
    %748 = vmatpush.msra.mxu0 0.0
    %749 = vmatpush.msra.mxu0 0.0
    %750 = vmatpush.msra.mxu0 0.0
    %751 = vmatpush.msra.mxu0 0.0
    %752 = vmatpush.msra.mxu0 %v555
    %753 = vmatpush.msra.mxu0 %v554
    %754 = vmatmul.f32.gmra.mxu0 %v736
    %v755 = vpop.f32.mrf.mxu0
    %v756 = vadd.f32 0.0, %v755
    %757 = vdwg.mxu0
    %760 = vset.pattern.permute.xlu0 0
    %761 = vperm.xlu0 %760, %v540
    %v762 = vpop.permute.xlu0 %761
    %763 = vset.pattern.permute.xlu0 0
    %764 = vperm.xlu0 %763, %v541
    %v765 = vpop.permute.xlu0 %764
    %v766 = vperm.slane %v762, %v300
    %v767 = vperm.slane %v765, %v302
    %v768 = vsel %vm304, %v767, %v766
    %v769 = vsel %vm342, %v768, 0
    %771 = vmatpush.msra.mxu0 0.0
    %772 = vmatpush.msra.mxu0 0.0
    %773 = vmatpush.msra.mxu0 0.0
    %774 = vmatpush.msra.mxu0 0.0
    %775 = vmatpush.msra.mxu0 0.0
    %776 = vmatpush.msra.mxu0 0.0
    %777 = vmatpush.msra.mxu0 0.0
    %778 = vmatpush.msra.mxu0 0.0
    %779 = vmatpush.msra.mxu0 0.0
    %780 = vmatpush.msra.mxu0 0.0
    %781 = vmatpush.msra.mxu0 0.0
    %782 = vmatpush.msra.mxu0 0.0
    %783 = vmatpush.msra.mxu0 0.0
    %784 = vmatpush.msra.mxu0 0.0
    %785 = vmatpush.msra.mxu0 %v557
    %786 = vmatpush.msra.mxu0 %v556
    %787 = vmatmul.f32.gmra.mxu0 %v769
    %v788 = vpop.f32.mrf.mxu0
    %v789 = vadd.f32 0.0, %v788
    %790 = vdwg.mxu0
    %793 = vset.pattern.permute.xlu0 0
    %794 = vperm.xlu0 %793, %v542
    %v795 = vpop.permute.xlu0 %794
    %796 = vset.pattern.permute.xlu0 0
    %797 = vperm.xlu0 %796, %v543
    %v798 = vpop.permute.xlu0 %797
    %v799 = vperm.slane %v795, %v300
    %v800 = vperm.slane %v798, %v302
    %v801 = vsel %vm304, %v800, %v799
    %v802 = vsel %vm342, %v801, 0
    %804 = vmatpush.msra.mxu0 0.0
    %805 = vmatpush.msra.mxu0 0.0
    %806 = vmatpush.msra.mxu0 0.0
    %807 = vmatpush.msra.mxu0 0.0
    %808 = vmatpush.msra.mxu0 0.0
    %809 = vmatpush.msra.mxu0 0.0
    %810 = vmatpush.msra.mxu0 0.0
    %811 = vmatpush.msra.mxu0 0.0
    %812 = vmatpush.msra.mxu0 0.0
    %813 = vmatpush.msra.mxu0 0.0
    %814 = vmatpush.msra.mxu0 0.0
    %815 = vmatpush.msra.mxu0 0.0
    %816 = vmatpush.msra.mxu0 0.0
    %817 = vmatpush.msra.mxu0 0.0
    %818 = vmatpush.msra.mxu0 %v559
    %819 = vmatpush.msra.mxu0 %v558
    %820 = vmatmul.f32.gmra.mxu0 %v802
    %v821 = vpop.f32.mrf.mxu0
    %v822 = vadd.f32 0.0, %v821
    %823 = vdwg.mxu0
    %v832 = vrot.slane %v624, 7
    %v833 = vsel %vm327, %v832, %v591
    %v834 = vrot.slane %v657, 6
    %v835 = vsel %vm329, %v834, %v833
    %v836 = vrot.slane %v690, 5
    %v837 = vsel %vm331, %v836, %v835
    %v838 = vrot.slane %v723, 4
    %v839 = vsel %vm333, %v838, %v837
    %v840 = vrot.slane %v756, 3
    %v841 = vsel %vm335, %v840, %v839
    %v842 = vrot.slane %v789, 2
    %v843 = vsel %vm337, %v842, %v841
    %v844 = vrot.slane %v822, 1
    %v845 = vsel %vm339, %v844, %v843
    %847 = vst.msk [vmem:[#allocation11] sm:$0xff] %vm101, %v845
    %v848 = vsel %vm327, %v603, %v570
    %v849 = vsel %vm329, %v636, %v848
    %v850 = vsel %vm331, %v669, %v849
    %v851 = vsel %vm333, %v702, %v850
    %v852 = vsel %vm335, %v735, %v851
    %v853 = vsel %vm337, %v768, %v852
    %v854 = vsel %vm339, %v801, %v853
    %856 = vst.msk [vmem:[#allocation12] sm:$0xff] %vm342, %v854
    // Predicated region
    $region46: #{tpu_custom_call.1} parent=1 // pred_check
      _
    $region47: #{tpu_custom_call.1} parent=1 // pred_check_branch
      %858 = sbr.rel (0) target = $region49
    $region48: #{tpu_custom_call.1} parent=1 // pred_region
      %860 = vsyncadd [#allocation5], 0
      %s862 = sshll.u32 [#allocation11], 4
      %s863 = int_to_ptr.vmem [resolvable:$true] %s862
      %s864 = sshll.u32 %s7, 4
      %s865 = int_to_ptr.hbm [resolvable:$true] %s864
      %867 = dma.vmem_to_hbm [thread:$0]  %s863, 128, %s865, [#allocation5]
    $region49: #{tpu_custom_call.1} parent=1 // pred_fallthru
      _
    // Predicated region
    $region50: #{tpu_custom_call.1} parent=1 // pred_check
      _
    $region51: #{tpu_custom_call.1} parent=1 // pred_check_branch
      %869 = sbr.rel (0) target = $region53
    $region52: #{tpu_custom_call.1} parent=1 // pred_region
      %871 = vsyncadd [#allocation13], 0
      %s873 = sshll.u32 [#allocation12], 4
      %s874 = int_to_ptr.vmem [resolvable:$true] %s873
      %s875 = sshll.u32 %s8, 4
      %s876 = int_to_ptr.hbm [resolvable:$true] %s875
      %878 = dma.vmem_to_hbm [thread:$0]  %s874, 128, %s876, [#allocation13]
    $region53: #{tpu_custom_call.1} parent=1 // pred_fallthru
      _
    // Predicated region
    $region54: #{tpu_custom_call.1} parent=1 // pred_check
      _
    $region55: #{tpu_custom_call.1} parent=1 // pred_check_branch
      %880 = sbr.rel (0) target = $region57
    $region56: #{tpu_custom_call.1} parent=1 // pred_region
      %882 = dma.done [#allocation5], 128
    $region57: #{tpu_custom_call.1} parent=1 // pred_fallthru
      _
    // Predicated region
    $region58: #{tpu_custom_call.1} parent=1 // pred_check
      _
    $region59: #{tpu_custom_call.1} parent=1 // pred_check_branch
      %884 = sbr.rel (0) target = $region61
    $region60: #{tpu_custom_call.1} parent=1 // pred_region
      %886 = dma.done [#allocation13], 128
    $region61: #{tpu_custom_call.1} parent=1 // pred_fallthru
      _
    %887 = vsyncpa [#allocation4], 1
    %888 = vsyncpa [#allocation7], 1
    %889 = vsyncpa [#allocation10], 1
    %890 = vsyncpa [#allocation5], 1
    %891 = vsyncpa [#allocation13], 1

</llo_original>
